<compile_context>
chip_gen: v5e
topology: v5e:2x2
jax: 0.10.0
libtpu: 0.0.40
codegen_flags: <defaults>
</compile_context>

<pallas_src>
import functools

import numpy as np

import jax
import jax.numpy as jnp
from jax.experimental import pallas as pl
from jax.experimental.pallas import tpu as pltpu


def _round_up(x: int, m: int) -> int:
    return ((x + m - 1) // m) * m


def _vmem_budget_bytes() -> int:
    """~3/4 of physical VMEM: 48 MiB on v7x, 96 MiB on v5e/v6e."""
    cap = None
    try:
        cap = getattr(pltpu.get_tpu_info(), "vmem_capacity_bytes", None)
    except Exception:
        cap = None
    if not cap:
        cap = 64 * 1024 * 1024  # conservative fallback = v7x physical per-core VMEM
    return int(cap) * 3 // 4


# -----------------------------------------------------------------------------
# Kernel: one (tm, tn) output tile = A(tm, K) @ W(K, tn) + bias, full K at once.
# Single MXU pass per tile, f32 accumulation, one unmasked lane-dense store.
# -----------------------------------------------------------------------------
def _patch_embed_kernel(a_ref, w_ref, b_ref, o_ref):
    acc = jnp.dot(a_ref[...], w_ref[...], preferred_element_type=jnp.float32)
    o_ref[...] = (acc + b_ref[...]).astype(o_ref.dtype)


def pack_projection(weight, bias, *, dtype=jnp.bfloat16, vmem_budget=None):
    """One-time repack of the Conv2d projection for the GEMM kernel (hoisted).

    weight: (E, C, kh, kw)  (PyTorch Conv2d layout);  bias: (E,)
    Returns (w_packed (K, Np), b_packed (1, Np), tn): Np is a multiple of tn,
    tn a multiple of 128 (lane-dense output stores).
    """
    E, C, kh, kw = weight.shape
    K = C * kh * kw
    if vmem_budget is None:
        vmem_budget = _vmem_budget_bytes()
    w_bytes = np.dtype(dtype).itemsize

    # VMEM guard (N side): keep the resident weight tile within ~1/3 of budget.
    Np0 = _round_up(E, 128)
    nb, tn = 1, Np0
    while tn > 128 and tn * K * w_bytes > vmem_budget // 3:
        nb += 1
        tn = _round_up(pl.cdiv(Np0, nb), 128)
    Np = tn * pl.cdiv(Np0, tn)

    w = weight.reshape(E, K).T.astype(dtype)       # (K, E), (c, i, j)-major K
    b = bias.astype(jnp.float32).reshape(1, E)
    if Np != E:
        w = jnp.pad(w, ((0, 0), (0, Np - E)))
        b = jnp.pad(b, ((0, 0), (0, Np - E)))
    return w, b, tn


def patch_embed_forward(x, w_packed, b_packed, kernel_size, embed_dim, *,
                        tn=None, out_dtype=jnp.bfloat16, block_m=512):
    """Forward of PatchEmbed.

    x:        (B, C, H, W) NCHW, like the PyTorch module.
    w_packed, b_packed, tn: from pack_projection().
    returns:  (B, H//kh, W//kw, embed_dim) in out_dtype
              == Conv2d(x).permute(0, 2, 3, 1)
    """
    kh, kw = kernel_size
    B, C, H, W = x.shape
    K, Np = w_packed.shape
    if tn is None:
        tn = Np
    assert K == C * kh * kw, "packed weight does not match channels / patch size"
    assert Np % tn == 0 and tn % 128 == 0
    assert H % kh == 0 and W % kw == 0, "PatchEmbed needs H, W divisible by patch"
    Hp, Wp = H // kh, W // kw
    M = B * Hp * Wp

    a_dtype = w_packed.dtype
    a_bytes = np.dtype(a_dtype).itemsize
    w_bytes = np.dtype(w_packed.dtype).itemsize
    out_bytes = np.dtype(out_dtype).itemsize
    budget = _vmem_budget_bytes()
    n_blocks = Np // tn

    # Patch extraction: ONE fused XLA cast+transpose pass over x (no K pad),
    # flattened in PyTorch (c, i, j) order to match the packed weight.
    # TODO(synk): in-kernel DMA gather via memory_space=pl.ANY to avoid
    # materializing `a` in HBM at all (halves A-side HBM traffic).
    a = (x.astype(a_dtype)
           .reshape(B, C, Hp, kh, Wp, kw)
           .transpose(0, 2, 4, 1, 3, 5)
           .reshape(M, K))

    # Balanced, 16-aligned M tiles; >= 2 (even count) blocks so v7x megacore
    # shards M across both TensorCores even at small batch.
    n_m_blocks = pl.cdiv(M, block_m)
    if M > 16:
        n_m_blocks = max(2, n_m_blocks)
        n_m_blocks += n_m_blocks % 2
    tm = _round_up(pl.cdiv(M, n_m_blocks), 16)

    # VMEM guard (M side): A + out double buffers must fit the budget.
    w_bufs = 1 if n_blocks == 1 else 2
    def _vmem_need(tm_):
        return (2 * tm_ * K * a_bytes                       # A, double-buffered
                + w_bufs * (K * tn * w_bytes + tn * 4)      # weight + bias
                + 2 * tm_ * tn * out_bytes                  # out, double-buffered
                + (2 << 20))                                # Mosaic scratch headroom
    while _vmem_need(tm) > budget and tm > 16:
        tm = max(16, _round_up(tm // 2, 16))

    Mp = _round_up(M, tm)
    if Mp != M:
        a = jnp.pad(a, ((0, Mp - M), (0, 0)))   # zero rows; sliced off below

    # Grid-invariant weight / bias: single resident VMEM buffer.
    if n_blocks == 1:
        w_spec = pl.BlockSpec((K, tn), lambda i, j: (0, j),
                              pipeline_mode=pl.Buffered(1))
        b_spec = pl.BlockSpec((1, tn), lambda i, j: (0, j),
                              pipeline_mode=pl.Buffered(1))
    else:
        w_spec = pl.BlockSpec((K, tn), lambda i, j: (0, j))
        b_spec = pl.BlockSpec((1, tn), lambda i, j: (0, j))

    out = pl.pallas_call(
        _patch_embed_kernel,
        out_shape=jax.ShapeDtypeStruct((Mp, Np), out_dtype),
        grid_spec=pltpu.PrefetchScalarGridSpec(
            num_scalar_prefetch=0,
            grid=(Mp // tm, n_blocks),
            in_specs=[
                pl.BlockSpec((tm, K), lambda i, j: (i, 0)),
                w_spec,
                b_spec,
            ],
            out_specs=pl.BlockSpec((tm, tn), lambda i, j: (i, j)),
        ),
        compiler_params=pltpu.CompilerParams(
            dimension_semantics=("parallel", "parallel"),
            vmem_limit_bytes=budget,
        ),
    )(a, w_packed, b_packed)

    return out[:M, :embed_dim].reshape(B, Hp, Wp, embed_dim)


if __name__ == "__main__":
    # Small, conv-consistent shapes: B=2, C=4, H=W=16, patch 8x8, embed_dim=32.
    B, C, H, W = 2, 4, 16, 16
    kh, kw = 8, 8
    E = 32

    key = jax.random.PRNGKey(0)
    kx, kwt, kb = jax.random.split(key, 3)
    x = jax.random.normal(kx, (B, C, H, W), dtype=jnp.float32)
    weight = jax.random.normal(kwt, (E, C, kh, kw), dtype=jnp.float32) * 0.02
    bias = jax.random.normal(kb, (E,), dtype=jnp.float32) * 0.02

    # One-time parameter repack (hoisted out of the per-call forward path).
    w_packed, b_packed, tn = pack_projection(weight, bias)

    fwd = jax.jit(functools.partial(
        patch_embed_forward, kernel_size=(kh, kw), embed_dim=E, tn=tn))
    out = jax.block_until_ready(fwd(x, w_packed, b_packed))

    # Reference: XLA conv (NCHW) + permute to NHWC, matching the PyTorch module.
    ref = jax.lax.conv_general_dilated(
        x, weight, window_strides=(kh, kw), padding="VALID",
        dimension_numbers=("NCHW", "OIHW", "NCHW"),
    ) + bias.reshape(1, E, 1, 1)
    ref = jnp.transpose(ref, (0, 2, 3, 1))

    assert out.shape == (B, H // kh, W // kw, E), out.shape
    assert out.dtype == jnp.bfloat16, out.dtype
    # bf16 operands + bf16 output (f32 accumulation) vs the f32 reference conv.
    max_err = float(jnp.max(jnp.abs(out.astype(jnp.float32) - ref)))
    assert max_err < 2e-2, max_err
    print("KERNEL_OK")
</pallas_src>

<mosaic_0001>
module attributes {stable_mosaic.version = 11 : i64} {
  func.func @_patch_embed_kernel(%arg0: i32, %arg1: i32, %arg2: memref<16x256xbf16, #tpu.memory_space<vmem>>, %arg3: memref<256x128xbf16, #tpu.memory_space<vmem>>, %arg4: memref<1x128xf32, #tpu.memory_space<vmem>>, %arg5: memref<16x128xbf16, #tpu.memory_space<vmem>>) attributes {dimension_semantics = [#tpu.dimension_semantics<parallel>, #tpu.dimension_semantics<parallel>], iteration_bounds = array<i64: 1, 1>, scalar_prefetch = 0 : i64, scratch_operands = 0 : i64, tpu.core_type = #tpu.core_type<tc>, window_params = [{transform_indices = @transform_0, window_bounds = array<i64: 16, 256>}, {pipeline_mode = #tpu.pipeline_mode<synchronous>, transform_indices = @transform_1, window_bounds = array<i64: 256, 128>}, {pipeline_mode = #tpu.pipeline_mode<synchronous>, transform_indices = @transform_2, window_bounds = array<i64: 1, 128>}, {transform_indices = @transform_3, window_bounds = array<i64: 16, 128>}]} {
    %c0 = arith.constant 0 : index
    %c0_0 = arith.constant 0 : index
    %0 = vector.load %arg2[%c0, %c0_0] : memref<16x256xbf16, #tpu.memory_space<vmem>>, vector<16x256xbf16>
    %c0_1 = arith.constant 0 : index
    %c0_2 = arith.constant 0 : index
    %1 = vector.load %arg3[%c0_1, %c0_2] : memref<256x128xbf16, #tpu.memory_space<vmem>>, vector<256x128xbf16>
    %cst = arith.constant dense<0.000000e+00> : vector<16x128xf32>
    %2 = tpu.matmul %0, %1, %cst {dimension_numbers = #tpu.dot_dimension_numbers<[1], [0], [0], [1], [0, 0, 1, 1], [], []>} : vector<16x256xbf16>, vector<256x128xbf16>, vector<16x128xf32> -> vector<16x128xf32>
    %c0_3 = arith.constant 0 : index
    %c0_4 = arith.constant 0 : index
    %3 = vector.load %arg4[%c0_3, %c0_4] : memref<1x128xf32, #tpu.memory_space<vmem>>, vector<1x128xf32>
    %4 = vector.broadcast %3 : vector<1x128xf32> to vector<16x128xf32>
    %5 = arith.addf %2, %4 : vector<16x128xf32>
    %6 = arith.truncf %5 : vector<16x128xf32> to vector<16x128xbf16>
    %c0_5 = arith.constant 0 : index
    %c0_6 = arith.constant 0 : index
    %7 = vector.load %arg5[%c0_5, %c0_6] : memref<16x128xbf16, #tpu.memory_space<vmem>>, vector<16x128xbf16>
    tpu.vector_store %arg5[%c0_5, %c0_6], %6 {strides = array<i32>} : memref<16x128xbf16, #tpu.memory_space<vmem>>, vector<16x128xbf16>,
    return
  }
  func.func @transform_0(%arg0: i32, %arg1: i32) -> (i32, i32) {
    %c0_i32 = arith.constant 0 : i32
    %c0_i32_0 = arith.constant 0 : i32
    return %arg0, %c0_i32 : i32, i32
  }
  func.func @transform_1(%arg0: i32, %arg1: i32) -> (i32, i32) {
    %c0_i32 = arith.constant 0 : i32
    %c0_i32_0 = arith.constant 0 : i32
    return %c0_i32, %arg1 : i32, i32
  }
  func.func @transform_2(%arg0: i32, %arg1: i32) -> (i32, i32) {
    %c0_i32 = arith.constant 0 : i32
    %c0_i32_0 = arith.constant 0 : i32
    return %c0_i32, %arg1 : i32, i32
  }
  func.func @transform_3(%arg0: i32, %arg1: i32) -> (i32, i32) {
    %c0_i32 = arith.constant 0 : i32
    return %arg0, %arg1 : i32, i32
  }
}

</mosaic_0001>

<llo_original>
// kernel: patch_embed_forward.1
$region0: #{patch_embed_forward.1}
  #allocation0 [shape = 'u32[]', space=smem, size = 0x4, offset = 0x4, fixed_abs, tag = 'smem constant byte address 0x4 - core index']
  #allocation1 [shape = 'u32[72,128]{1,0:T(1,128)}', space=vmem, size = 0x9000, scoped, tag = 'internal scratch']
  %s0 = inlined_call_operand.vmem [shape: bf16[16,256], index: 0, kind: input, shape index: {}]
  %s1 = inlined_call_operand.vmem [shape: bf16[256,128], index: 1, kind: input, shape index: {}]
  %s2 = inlined_call_operand.vmem [shape: f32[1,128], index: 2, kind: input, shape index: {}]
  %s3 = inlined_call_operand.vmem [shape: bf16[16,128], index: 3, kind: output, shape index: {}]
  %s4 = sld [smem:[#allocation0]]
  $region22: #{patch_embed_forward.1} parent=0
    _
  %s6 = ssub.s32 1, %s4
  %s7 = scalar_select 0, %s6, %s4
  // Predicated region
  $region2: #{patch_embed_forward.1} parent=0 // pred_check
    _
  $region3: #{patch_embed_forward.1} parent=0 // pred_check_branch
    %9 = sbr.rel (0) target = $region5
  $region4: #{patch_embed_forward.1} parent=0 // pred_region
    _
  $region5: #{patch_embed_forward.1} parent=0 // pred_fallthru
    _
  // Predicated region
  $region6: #{patch_embed_forward.1} parent=0 // pred_check
    _
  $region7: #{patch_embed_forward.1} parent=0 // pred_check_branch
    %11 = sbr.rel (0) target = $region9
  $region8: #{patch_embed_forward.1} parent=0 // pred_region
    _
  $region9: #{patch_embed_forward.1} parent=0 // pred_fallthru
    _
  // Predicated region
  $region10: #{patch_embed_forward.1} parent=0 // pred_check
    _
  $region11: #{patch_embed_forward.1} parent=0 // pred_check_branch
    %13 = sbr.rel (0) target = $region13
  $region12: #{patch_embed_forward.1} parent=0 // pred_region
    _
  $region13: #{patch_embed_forward.1} parent=0 // pred_fallthru
    _
  %v14 = vld [vmem:[%s0] sm:$0xff]
  %v15 = vld [vmem:[%s0 + $0x8] sm:$0xff]
  %v16 = vld [vmem:[%s1] sm:$0xf]
  %v17 = vld [vmem:[%s1 + $0x4] sm:$0xf]
  %v18 = vld [vmem:[%s1 + $0x8] sm:$0xf]
  %v19 = vld [vmem:[%s1 + $0xc] sm:$0xf]
  %v20 = vld [vmem:[%s1 + $0x10] sm:$0xf]
  %v21 = vld [vmem:[%s1 + $0x14] sm:$0xf]
  %v22 = vld [vmem:[%s1 + $0x18] sm:$0xf]
  %v23 = vld [vmem:[%s1 + $0x1c] sm:$0xf]
  %v24 = vld [vmem:[%s1 + $0x20] sm:$0xf]
  %v25 = vld [vmem:[%s1 + $0x24] sm:$0xf]
  %v26 = vld [vmem:[%s1 + $0x28] sm:$0xf]
  %v27 = vld [vmem:[%s1 + $0x2c] sm:$0xf]
  %v28 = vld [vmem:[%s1 + $0x30] sm:$0xf]
  %v29 = vld [vmem:[%s1 + $0x34] sm:$0xf]
  %v30 = vld [vmem:[%s1 + $0x38] sm:$0xf]
  %v31 = vld [vmem:[%s1 + $0x3c] sm:$0xf]
  %v32 = vld [vmem:[%s1 + $0x40] sm:$0xf]
  %v33 = vld [vmem:[%s1 + $0x44] sm:$0xf]
  %v34 = vld [vmem:[%s1 + $0x48] sm:$0xf]
  %v35 = vld [vmem:[%s1 + $0x4c] sm:$0xf]
  %v36 = vld [vmem:[%s1 + $0x50] sm:$0xf]
  %v37 = vld [vmem:[%s1 + $0x54] sm:$0xf]
  %v38 = vld [vmem:[%s1 + $0x58] sm:$0xf]
  %v39 = vld [vmem:[%s1 + $0x5c] sm:$0xf]
  %v40 = vld [vmem:[%s1 + $0x60] sm:$0xf]
  %v41 = vld [vmem:[%s1 + $0x64] sm:$0xf]
  %v42 = vld [vmem:[%s1 + $0x68] sm:$0xf]
  %v43 = vld [vmem:[%s1 + $0x6c] sm:$0xf]
  %v44 = vld [vmem:[%s1 + $0x70] sm:$0xf]
  %v45 = vld [vmem:[%s1 + $0x74] sm:$0xf]
  %v46 = vld [vmem:[%s1 + $0x78] sm:$0xf]
  %v47 = vld [vmem:[%s1 + $0x7c] sm:$0xf]
  %v48 = vld [vmem:[%s2] sm:$0x1]
  %v50 = vperm.slane %v48, 0
  %v54 = vunpack.c.l.b16 %v14
  %v55 = vunpack.c.h.b16 %v14
  %v56 = vunpack.c.l.b16 %v15
  %v57 = vunpack.c.h.b16 %v15
  %v58 = vpack.c.b16 %v56, %v54
  %v59 = vpack.c.b16 %v57, %v55
  %v94 = vunpack.c.l.b16 %v16
  %v95 = vunpack.c.l.b16 %v17
  %v96 = vunpack.c.l.b16 %v18
  %v97 = vunpack.c.l.b16 %v19
  %v98 = vunpack.c.l.b16 %v20
  %v99 = vunpack.c.l.b16 %v21
  %v100 = vunpack.c.l.b16 %v22
  %v101 = vunpack.c.l.b16 %v23
  %v102 = vunpack.c.l.b16 %v24
  %v103 = vunpack.c.l.b16 %v25
  %v104 = vunpack.c.l.b16 %v26
  %v105 = vunpack.c.l.b16 %v27
  %v106 = vunpack.c.l.b16 %v28
  %v107 = vunpack.c.l.b16 %v29
  %v108 = vunpack.c.l.b16 %v30
  %v109 = vunpack.c.l.b16 %v31
  %v110 = vunpack.c.l.b16 %v32
  %v111 = vunpack.c.l.b16 %v33
  %v112 = vunpack.c.l.b16 %v34
  %v113 = vunpack.c.l.b16 %v35
  %v114 = vunpack.c.l.b16 %v36
  %v115 = vunpack.c.l.b16 %v37
  %v116 = vunpack.c.l.b16 %v38
  %v117 = vunpack.c.l.b16 %v39
  %v118 = vunpack.c.l.b16 %v40
  %v119 = vunpack.c.l.b16 %v41
  %v120 = vunpack.c.l.b16 %v42
  %v121 = vunpack.c.l.b16 %v43
  %v122 = vunpack.c.l.b16 %v44
  %v123 = vunpack.c.l.b16 %v45
  %v124 = vunpack.c.l.b16 %v46
  %v125 = vunpack.c.l.b16 %v47
  %v126 = vpack.c.b16 %v95, %v94
  %v127 = vpack.c.b16 %v97, %v96
  %v128 = vpack.c.b16 %v99, %v98
  %v129 = vpack.c.b16 %v101, %v100
  %v130 = vpack.c.b16 %v103, %v102
  %v131 = vpack.c.b16 %v105, %v104
  %v132 = vpack.c.b16 %v107, %v106
  %v133 = vpack.c.b16 %v109, %v108
  %v134 = vpack.c.b16 %v111, %v110
  %v135 = vpack.c.b16 %v113, %v112
  %v136 = vpack.c.b16 %v115, %v114
  %v137 = vpack.c.b16 %v117, %v116
  %v138 = vpack.c.b16 %v119, %v118
  %v139 = vpack.c.b16 %v121, %v120
  %v140 = vpack.c.b16 %v123, %v122
  %v141 = vpack.c.b16 %v125, %v124
  %158 = vmatpush.bf16.msra.mxu0 %v133
  %159 = vmatpush.bf16.msra.mxu0 %v132
  %160 = vmatpush.bf16.msra.mxu0 %v131
  %161 = vmatpush.bf16.msra.mxu0 %v130
  %162 = vmatpush.bf16.msra.mxu0 %v129
  %163 = vmatpush.bf16.msra.mxu0 %v128
  %164 = vmatpush.bf16.msra.mxu0 %v127
  %165 = vmatpush.bf16.msra.mxu0 %v126
  %166 = vmatmul.bf16.gmra.mxu0 %v58
  %v167 = vpop.f32.mrf.mxu0
  %v168 = vadd.f32 %v50, %v167
  %v169 = vpop.f32.mrf.mxu0
  %v170 = vadd.f32 %v50, %v169
  %171 = vdwg.mxu0
  %172 = vmatpush.bf16.msra.mxu0 %v141
  %173 = vmatpush.bf16.msra.mxu0 %v140
  %174 = vmatpush.bf16.msra.mxu0 %v139
  %175 = vmatpush.bf16.msra.mxu0 %v138
  %176 = vmatpush.bf16.msra.mxu0 %v137
  %177 = vmatpush.bf16.msra.mxu0 %v136
  %178 = vmatpush.bf16.msra.mxu0 %v135
  %179 = vmatpush.bf16.msra.mxu0 %v134
  %180 = vmatmul.bf16.gmra.mxu0 %v59
  %v181 = vpop.f32.mrf.mxu0
  %v182 = vadd.f32 %v168, %v181
  %v183 = vpop.f32.mrf.mxu0
  %v184 = vadd.f32 %v170, %v183
  %185 = vdwg.mxu0
  %v186 = vpack.c.bf16 %v182, %v182
  %v187 = vpack.c.bf16 %v184, %v184
  %188 = vst [vmem:[%s3] sm:$0xf] %v186
  %189 = vst [vmem:[%s3 + $0x4] sm:$0xf] %v187
  // Predicated region
  $region14: #{patch_embed_forward.1} parent=0 // pred_check
    _
  $region15: #{patch_embed_forward.1} parent=0 // pred_check_branch
    %191 = sbr.rel (0) target = $region17
  $region16: #{patch_embed_forward.1} parent=0 // pred_region
    _
  $region17: #{patch_embed_forward.1} parent=0 // pred_fallthru
    _
  // Predicated region
  $region18: #{patch_embed_forward.1} parent=0 // pred_check
    _
  $region19: #{patch_embed_forward.1} parent=0 // pred_check_branch
    %193 = sbr.rel (0) target = $region21
  $region20: #{patch_embed_forward.1} parent=0 // pred_region
    _
  $region21: #{patch_embed_forward.1} parent=0 // pred_fallthru
    _

</llo_original>
